<compile_context>
chip_gen: v7x
topology: tpu7x:2x2x1
jax: 0.10.0
libtpu: 0.0.40
codegen_flags: <defaults>
</compile_context>

<pallas_src>
import functools

import jax
import jax.numpy as jnp
from jax.experimental import pallas as pl
from jax.experimental.pallas import tpu as pltpu

_BN_EPS = 1e-5


# ----------------------------- Pallas kernel -----------------------------

def _channel_group_sums(v, cout, w):
    """Reduce a (1, W*Cout) lane row over its W groups.

    Returns a (1, W*Cout) row where every lane l holds the full per-channel
    sum for channel l % Cout (already broadcast across W), using a log2(W)
    rotate-and-add tree on the lane axis.  Pure f32 adds, no lane-crossing
    reshape, no MXU (keeps batch-stat precision).
    """
    assert (w & (w - 1)) == 0, "W must be a power of two for the roll tree"
    shift = cout
    while shift < cout * w:
        v = v + pltpu.roll(v, shift, axis=1)
        shift *= 2
    return v


def _double_conv_kernel(x_ref, mt_ref, mb_ref, wb1_ref, wb2k_ref,
                        g1_ref, b1_ref, g2_ref, b2_ref, out_ref,
                        *, W, cout, eps):
    """Fused conv1 -> BN1 -> ReLU -> conv2 -> BN2 -> ReLU over the whole batch.

    Refs (single grid step, whole batch):
      x_ref   : (M, W*Cin)          f32, M = N*H, lane axis = W*Cin
      mt_ref  : (M, 1)              f32, 0 on the first row of every image
      mb_ref  : (M, 1)              f32, 0 on the last row of every image
      wb1_ref : (3, W*Cin, W*Cout)  bf16 banded conv1 weights (one per dy)
      wb2k_ref: (3*W*Cout, W*Cout)  bf16 banded conv2 weights, dy taps stacked on K
      g*_ref/b*_ref : (1, W*Cout)   f32 gamma/beta tiled across W
      out_ref : (M, W*Cout)         f32 final activations (lane-dense stores)
    """
    bf = jnp.bfloat16
    M = x_ref.shape[0]
    cnt = float(M * W)                    # elements per channel for batch stats

    x = x_ref[...]                        # (M, W*Cin) f32
    mt = mt_ref[...]
    mb = mb_ref[...]

    # ---- conv1: 3x3 'same' conv as 3 banded MXU matmuls (K = W*Cin) ----
    # 'Same' padding along W is folded into zeros of the band matrices; the dy
    # shift is an in-VMEM sublane roll masked at image boundaries.
    x_dn = pltpu.roll(x, 1, axis=0) * mt          # row r holds x[r-1]
    x_up = pltpu.roll(x, M - 1, axis=0) * mb      # row r holds x[r+1]
    y1 = jnp.dot(x_dn.astype(bf), wb1_ref[0], preferred_element_type=jnp.float32)
    y1 = y1 + jnp.dot(x.astype(bf), wb1_ref[1], preferred_element_type=jnp.float32)
    y1 = y1 + jnp.dot(x_up.astype(bf), wb1_ref[2], preferred_element_type=jnp.float32)

    # ---- BN1 (training-mode batch stats) + ReLU1, entirely in VMEM ----
    s1 = _channel_group_sums(jnp.sum(y1, axis=0, keepdims=True), cout, W)
    q1 = _channel_group_sums(jnp.sum(y1 * y1, axis=0, keepdims=True), cout, W)
    mean1 = s1 / cnt
    var1 = jnp.maximum(q1 / cnt - mean1 * mean1, 0.0)     # biased var (training)
    scale1 = g1_ref[...] * jax.lax.rsqrt(var1 + eps)
    shift1 = b1_ref[...] - mean1 * scale1
    a1 = jnp.maximum(y1 * scale1 + shift1, 0.0)           # (M, W*Cout) f32

    # ---- conv2: single MXU matmul, dy taps concatenated on K (3*128 lanes) ----
    a_dn = pltpu.roll(a1, 1, axis=0) * mt
    a_up = pltpu.roll(a1, M - 1, axis=0) * mb
    a_cat = jnp.concatenate([a_dn, a1, a_up], axis=1).astype(bf)   # (M, 3*W*Cout)
    y2 = jnp.dot(a_cat, wb2k_ref[...], preferred_element_type=jnp.float32)

    # ---- BN2 + ReLU2 ----
    s2 = _channel_group_sums(jnp.sum(y2, axis=0, keepdims=True), cout, W)
    q2 = _channel_group_sums(jnp.sum(y2 * y2, axis=0, keepdims=True), cout, W)
    mean2 = s2 / cnt
    var2 = jnp.maximum(q2 / cnt - mean2 * mean2, 0.0)
    scale2 = g2_ref[...] * jax.lax.rsqrt(var2 + eps)
    shift2 = b2_ref[...] - mean2 * scale2
    out_ref[...] = jnp.maximum(y2 * scale2 + shift2, 0.0)  # lane-dense store


# ----------------------------- host-side prep -----------------------------

def _band_weights(w_hwio, W):
    """(3, 3, Cin, Cout) HWIO -> (3, W*Cin, W*Cout) banded matrices.

    band[dy, wi*Cin+ci, wo*Cout+co] = w[dy, dx, ci, co] with wi = wo + dx - 1;
    out-of-range taps stay zero, so 'same' padding along W is folded into the
    weights and no padded activation copy is needed.
    """
    kh, kw, cin, cout = w_hwio.shape
    band = jnp.zeros((kh, W, cin, W, cout), w_hwio.dtype)
    wo = jnp.arange(W)
    for dx in range(kw):
        wi = wo + dx - (kw // 2)
        onehot = (jnp.arange(W)[:, None] == wi[None, :]).astype(w_hwio.dtype)
        band = band + (onehot[None, :, None, :, None]
                       * w_hwio[:, dx][:, None, :, None, :])
    return band.reshape(kh, W * cin, W * cout)


def prepare_double_conv(params, W):
    """Precompute banded bf16 weights and lane-tiled BN affines.

    Called once per weight update, OUTSIDE the jitted per-step forward (the
    band build is O(9*W^2*Cin*Cout) and must not be redone every call).
    Conv biases b1/b2 are dropped on purpose: under training-mode BatchNorm a
    per-channel constant is exactly cancelled by the batch-mean subtraction.
    """
    cout = params["w1"].shape[-1]
    wb1 = _band_weights(params["w1"], W).astype(jnp.bfloat16)
    wb2 = _band_weights(params["w2"], W).astype(jnp.bfloat16)
    wb2k = wb2.reshape(3 * W * cout, W * cout)        # dy taps stacked on K
    tile = lambda p: jnp.tile(p.astype(jnp.float32), W)[None, :]   # (1, W*Cout)
    return {
        "wb1": wb1, "wb2k": wb2k,
        "g1": tile(params["g1"]), "be1": tile(params["be1"]),
        "g2": tile(params["g2"]), "be2": tile(params["be2"]),
    }


# ----------------------------- forward -----------------------------

@jax.jit
def double_conv_forward(x_nchw, prep):
    N, Cin, H, W = x_nchw.shape
    WCout = prep["g1"].shape[-1]
    Cout = WCout // W
    M = N * H

    # NCHW -> lane-dense flattened NHWC (N*H, W*C).  The two layout transposes
    # stay in XLA: fusing them in-kernel needs rank-4 relayouts that cost more
    # in lowering risk than they save at these sizes.
    x = jnp.transpose(x_nchw, (0, 2, 3, 1)).reshape(M, W * Cin)

    # Image-boundary row masks (0 on the first / last row of every image) so
    # the dy rolls never leak across images and 'same' padding along H holds.
    row = jnp.arange(M) % H
    m_top = (row != 0).astype(jnp.float32)[:, None]
    m_bot = (row != H - 1).astype(jnp.float32)[:, None]

    kernel = functools.partial(_double_conv_kernel, W=W, cout=Cout, eps=_BN_EPS)
    out = pl.pallas_call(
        kernel,
        out_shape=jax.ShapeDtypeStruct((M, WCout), jnp.float32),
        grid_spec=pltpu.PrefetchScalarGridSpec(
            num_scalar_prefetch=0,
            grid=(1,),
            in_specs=[
                pl.BlockSpec((M, W * Cin), lambda i: (0, 0)),
                pl.BlockSpec((M, 1), lambda i: (0, 0)),
                pl.BlockSpec((M, 1), lambda i: (0, 0)),
                pl.BlockSpec((3, W * Cin, WCout), lambda i: (0, 0, 0)),
                pl.BlockSpec((3 * WCout, WCout), lambda i: (0, 0)),
                pl.BlockSpec((1, WCout), lambda i: (0, 0)),
                pl.BlockSpec((1, WCout), lambda i: (0, 0)),
                pl.BlockSpec((1, WCout), lambda i: (0, 0)),
                pl.BlockSpec((1, WCout), lambda i: (0, 0)),
            ],
            out_specs=pl.BlockSpec((M, WCout), lambda i: (0, 0)),
        ),
        compiler_params=pltpu.CompilerParams(
            dimension_semantics=("arbitrary",)),
    )(x, m_top, m_bot, prep["wb1"], prep["wb2k"],
      prep["g1"], prep["be1"], prep["g2"], prep["be2"])

    out = out.reshape(N, H, W, Cout)
    return jnp.transpose(out, (0, 3, 1, 2))            # -> NCHW


# ----------------------------- pure-JAX reference -----------------------------

def ref_forward(x_nchw, params, eps=_BN_EPS):
    def conv(x, w_hwio, b):
        w_oihw = jnp.transpose(w_hwio, (3, 2, 0, 1))
        y = jax.lax.conv_general_dilated(
            x, w_oihw, window_strides=(1, 1), padding=((1, 1), (1, 1)),
            dimension_numbers=("NCHW", "OIHW", "NCHW"))
        return y + b.reshape(1, -1, 1, 1)

    def bnr(y, g, be):
        m = jnp.mean(y, axis=(0, 2, 3), keepdims=True)
        v = jnp.mean(jnp.square(y - m), axis=(0, 2, 3), keepdims=True)
        yn = (y - m) / jnp.sqrt(v + eps)
        return jnp.maximum(yn * g.reshape(1, -1, 1, 1) + be.reshape(1, -1, 1, 1), 0.0)

    y = bnr(conv(x_nchw, params["w1"], params["b1"]), params["g1"], params["be1"])
    y = bnr(conv(y, params["w2"], params["b2"]), params["g2"], params["be2"])
    return y


# ----------------------------- main -----------------------------

if __name__ == "__main__":
    N, in_ch, out_ch, H, W = 2, 4, 8, 16, 16
    key = jax.random.PRNGKey(0)
    k = jax.random.split(key, 9)

    x = jax.random.normal(k[0], (N, in_ch, H, W), dtype=jnp.float32)

    params = {
        "w1": 0.1 * jax.random.normal(k[1], (3, 3, in_ch, out_ch), jnp.float32),
        "b1": 0.1 * jax.random.normal(k[2], (out_ch,), jnp.float32),
        "g1": 1.0 + 0.1 * jax.random.normal(k[3], (out_ch,), jnp.float32),
        "be1": 0.1 * jax.random.normal(k[4], (out_ch,), jnp.float32),
        "w2": 0.1 * jax.random.normal(k[5], (3, 3, out_ch, out_ch), jnp.float32),
        "b2": 0.1 * jax.random.normal(k[6], (out_ch,), jnp.float32),
        "g2": 1.0 + 0.1 * jax.random.normal(k[7], (out_ch,), jnp.float32),
        "be2": 0.1 * jax.random.normal(k[8], (out_ch,), jnp.float32),
    }

    # Host-side, once per weight update (hoisted out of the jitted forward).
    prep = prepare_double_conv(params, W)

    out = jax.block_until_ready(double_conv_forward(x, prep))
    ref = jax.block_until_ready(ref_forward(x, params))

    assert out.shape == (N, out_ch, H, W), out.shape
    # bf16 MXU operands vs. the f32 reference -> allow a few 1e-3..1e-2 of error.
    assert jnp.allclose(out, ref, atol=2e-2, rtol=2e-2), float(
        jnp.max(jnp.abs(out - ref)))

    print("KERNEL_OK")
</pallas_src>

<mosaic_0001>
module attributes {stable_mosaic.version = 11 : i64} {
  func.func @_double_conv_kernel(%arg0: i32, %arg1: memref<32x64xf32, #tpu.memory_space<vmem>>, %arg2: memref<32x1xf32, #tpu.memory_space<vmem>>, %arg3: memref<32x1xf32, #tpu.memory_space<vmem>>, %arg4: memref<3x64x128xbf16, #tpu.memory_space<vmem>>, %arg5: memref<384x128xbf16, #tpu.memory_space<vmem>>, %arg6: memref<1x128xf32, #tpu.memory_space<vmem>>, %arg7: memref<1x128xf32, #tpu.memory_space<vmem>>, %arg8: memref<1x128xf32, #tpu.memory_space<vmem>>, %arg9: memref<1x128xf32, #tpu.memory_space<vmem>>, %arg10: memref<32x128xf32, #tpu.memory_space<vmem>>) attributes {dimension_semantics = [#tpu.dimension_semantics<arbitrary>], iteration_bounds = array<i64: 1>, scalar_prefetch = 0 : i64, scratch_operands = 0 : i64, tpu.core_type = #tpu.core_type<tc>, window_params = [{pipeline_mode = #tpu.pipeline_mode<synchronous>, transform_indices = @transform_0, window_bounds = array<i64: 32, 64>}, {pipeline_mode = #tpu.pipeline_mode<synchronous>, transform_indices = @transform_1, window_bounds = array<i64: 32, 1>}, {pipeline_mode = #tpu.pipeline_mode<synchronous>, transform_indices = @transform_2, window_bounds = array<i64: 32, 1>}, {pipeline_mode = #tpu.pipeline_mode<synchronous>, transform_indices = @transform_3, window_bounds = array<i64: 3, 64, 128>}, {pipeline_mode = #tpu.pipeline_mode<synchronous>, transform_indices = @transform_4, window_bounds = array<i64: 384, 128>}, {pipeline_mode = #tpu.pipeline_mode<synchronous>, transform_indices = @transform_5, window_bounds = array<i64: 1, 128>}, {pipeline_mode = #tpu.pipeline_mode<synchronous>, transform_indices = @transform_6, window_bounds = array<i64: 1, 128>}, {pipeline_mode = #tpu.pipeline_mode<synchronous>, transform_indices = @transform_7, window_bounds = array<i64: 1, 128>}, {pipeline_mode = #tpu.pipeline_mode<synchronous>, transform_indices = @transform_8, window_bounds = array<i64: 1, 128>}, {pipeline_mode = #tpu.pipeline_mode<synchronous>, transform_indices = @transform_9, window_bounds = array<i64: 32, 128>}]} {
    %c0 = arith.constant 0 : index
    %c0_0 = arith.constant 0 : index
    %0 = vector.load %arg1[%c0, %c0_0] : memref<32x64xf32, #tpu.memory_space<vmem>>, vector<32x64xf32>
    %c0_1 = arith.constant 0 : index
    %c0_2 = arith.constant 0 : index
    %1 = vector.load %arg2[%c0_1, %c0_2] : memref<32x1xf32, #tpu.memory_space<vmem>>, vector<32x1xf32>
    %c0_3 = arith.constant 0 : index
    %c0_4 = arith.constant 0 : index
    %2 = vector.load %arg3[%c0_3, %c0_4] : memref<32x1xf32, #tpu.memory_space<vmem>>, vector<32x1xf32>
    %c1_i32 = arith.constant 1 : i32
    %3 = tpu.dynamic_rotate %0 by %c1_i32 dim 0 : vector<32x64xf32>, i32 -> vector<32x64xf32>
    %4 = vector.broadcast %1 : vector<32x1xf32> to vector<32x64xf32>
    %5 = arith.mulf %3, %4 : vector<32x64xf32>
    %c31_i32 = arith.constant 31 : i32
    %6 = tpu.dynamic_rotate %0 by %c31_i32 dim 0 : vector<32x64xf32>, i32 -> vector<32x64xf32>
    %7 = vector.broadcast %2 : vector<32x1xf32> to vector<32x64xf32>
    %8 = arith.mulf %6, %7 : vector<32x64xf32>
    %9 = arith.truncf %5 : vector<32x64xf32> to vector<32x64xbf16>
    %c0_5 = arith.constant 0 : index
    %c0_6 = arith.constant 0 : index
    %c0_7 = arith.constant 0 : index
    %10 = vector.load %arg4[%c0_5, %c0_6, %c0_7] : memref<3x64x128xbf16, #tpu.memory_space<vmem>>, vector<1x64x128xbf16>
    %11 = vector.shape_cast %10 : vector<1x64x128xbf16> to vector<64x128xbf16>
    %cst = arith.constant dense<0.000000e+00> : vector<32x128xf32>
    %12 = tpu.matmul %9, %11, %cst {dimension_numbers = #tpu.dot_dimension_numbers<[1], [0], [0], [1], [0, 0, 1, 1], [], []>} : vector<32x64xbf16>, vector<64x128xbf16>, vector<32x128xf32> -> vector<32x128xf32>
    %13 = arith.truncf %0 : vector<32x64xf32> to vector<32x64xbf16>
    %c1 = arith.constant 1 : index
    %c0_8 = arith.constant 0 : index
    %c0_9 = arith.constant 0 : index
    %14 = vector.load %arg4[%c1, %c0_8, %c0_9] : memref<3x64x128xbf16, #tpu.memory_space<vmem>>, vector<1x64x128xbf16>
    %15 = vector.shape_cast %14 : vector<1x64x128xbf16> to vector<64x128xbf16>
    %cst_10 = arith.constant dense<0.000000e+00> : vector<32x128xf32>
    %16 = tpu.matmul %13, %15, %cst_10 {dimension_numbers = #tpu.dot_dimension_numbers<[1], [0], [0], [1], [0, 0, 1, 1], [], []>} : vector<32x64xbf16>, vector<64x128xbf16>, vector<32x128xf32> -> vector<32x128xf32>
    %17 = arith.addf %12, %16 : vector<32x128xf32>
    %18 = arith.truncf %8 : vector<32x64xf32> to vector<32x64xbf16>
    %c2 = arith.constant 2 : index
    %c0_11 = arith.constant 0 : index
    %c0_12 = arith.constant 0 : index
    %19 = vector.load %arg4[%c2, %c0_11, %c0_12] : memref<3x64x128xbf16, #tpu.memory_space<vmem>>, vector<1x64x128xbf16>
    %20 = vector.shape_cast %19 : vector<1x64x128xbf16> to vector<64x128xbf16>
    %cst_13 = arith.constant dense<0.000000e+00> : vector<32x128xf32>
    %21 = tpu.matmul %18, %20, %cst_13 {dimension_numbers = #tpu.dot_dimension_numbers<[1], [0], [0], [1], [0, 0, 1, 1], [], []>} : vector<32x64xbf16>, vector<64x128xbf16>, vector<32x128xf32> -> vector<32x128xf32>
    %22 = arith.addf %17, %21 : vector<32x128xf32>
    %cst_14 = arith.constant dense<0.000000e+00> : vector<128xf32>
    %23 = vector.multi_reduction <add>, %22, %cst_14 [0] : vector<32x128xf32> to vector<128xf32>
    %24 = vector.shape_cast %23 : vector<128xf32> to vector<1x128xf32>
    %c8_i32 = arith.constant 8 : i32
    %25 = tpu.dynamic_rotate %24 by %c8_i32 dim 1 : vector<1x128xf32>, i32 -> vector<1x128xf32>
    %26 = arith.addf %24, %25 : vector<1x128xf32>
    %c16_i32 = arith.constant 16 : i32
    %27 = tpu.dynamic_rotate %26 by %c16_i32 dim 1 : vector<1x128xf32>, i32 -> vector<1x128xf32>
    %28 = arith.addf %26, %27 : vector<1x128xf32>
    %c32_i32 = arith.constant 32 : i32
    %29 = tpu.dynamic_rotate %28 by %c32_i32 dim 1 : vector<1x128xf32>, i32 -> vector<1x128xf32>
    %30 = arith.addf %28, %29 : vector<1x128xf32>
    %c64_i32 = arith.constant 64 : i32
    %31 = tpu.dynamic_rotate %30 by %c64_i32 dim 1 : vector<1x128xf32>, i32 -> vector<1x128xf32>
    %32 = arith.addf %30, %31 : vector<1x128xf32>
    %33 = arith.mulf %22, %22 : vector<32x128xf32>
    %cst_15 = arith.constant dense<0.000000e+00> : vector<128xf32>
    %34 = vector.multi_reduction <add>, %33, %cst_15 [0] : vector<32x128xf32> to vector<128xf32>
    %35 = vector.shape_cast %34 : vector<128xf32> to vector<1x128xf32>
    %c8_i32_16 = arith.constant 8 : i32
    %36 = tpu.dynamic_rotate %35 by %c8_i32_16 dim 1 : vector<1x128xf32>, i32 -> vector<1x128xf32>
    %37 = arith.addf %35, %36 : vector<1x128xf32>
    %c16_i32_17 = arith.constant 16 : i32
    %38 = tpu.dynamic_rotate %37 by %c16_i32_17 dim 1 : vector<1x128xf32>, i32 -> vector<1x128xf32>
    %39 = arith.addf %37, %38 : vector<1x128xf32>
    %c32_i32_18 = arith.constant 32 : i32
    %40 = tpu.dynamic_rotate %39 by %c32_i32_18 dim 1 : vector<1x128xf32>, i32 -> vector<1x128xf32>
    %41 = arith.addf %39, %40 : vector<1x128xf32>
    %c64_i32_19 = arith.constant 64 : i32
    %42 = tpu.dynamic_rotate %41 by %c64_i32_19 dim 1 : vector<1x128xf32>, i32 -> vector<1x128xf32>
    %43 = arith.addf %41, %42 : vector<1x128xf32>
    %cst_20 = arith.constant 5.120000e+02 : f32
    %44 = vector.broadcast %cst_20 : f32 to vector<1x128xf32>
    %45 = arith.divf %32, %44 : vector<1x128xf32>
    %cst_21 = arith.constant 5.120000e+02 : f32
    %46 = vector.broadcast %cst_21 : f32 to vector<1x128xf32>
    %47 = arith.divf %43, %46 : vector<1x128xf32>
    %48 = arith.mulf %45, %45 : vector<1x128xf32>
    %49 = arith.subf %47, %48 : vector<1x128xf32>
    %cst_22 = arith.constant 0.000000e+00 : f32
    %50 = vector.broadcast %cst_22 : f32 to vector<1x128xf32>
    %51 = arith.maximumf %49, %50 : vector<1x128xf32>
    %c0_23 = arith.constant 0 : index
    %c0_24 = arith.constant 0 : index
    %52 = vector.load %arg6[%c0_23, %c0_24] : memref<1x128xf32, #tpu.memory_space<vmem>>, vector<1x128xf32>
    %cst_25 = arith.constant 9.99999974E-6 : f32
    %53 = vector.broadcast %cst_25 : f32 to vector<1x128xf32>
    %54 = arith.addf %51, %53 : vector<1x128xf32>
    %55 = math.rsqrt %54 : vector<1x128xf32>
    %56 = arith.mulf %52, %55 : vector<1x128xf32>
    %c0_26 = arith.constant 0 : index
    %c0_27 = arith.constant 0 : index
    %57 = vector.load %arg7[%c0_26, %c0_27] : memref<1x128xf32, #tpu.memory_space<vmem>>, vector<1x128xf32>
    %58 = arith.mulf %45, %56 : vector<1x128xf32>
    %59 = arith.subf %57, %58 : vector<1x128xf32>
    %60 = vector.broadcast %56 : vector<1x128xf32> to vector<32x128xf32>
    %61 = arith.mulf %22, %60 : vector<32x128xf32>
    %62 = vector.broadcast %59 : vector<1x128xf32> to vector<32x128xf32>
    %63 = arith.addf %61, %62 : vector<32x128xf32>
    %cst_28 = arith.constant 0.000000e+00 : f32
    %64 = vector.broadcast %cst_28 : f32 to vector<32x128xf32>
    %65 = arith.maximumf %63, %64 : vector<32x128xf32>
    %c1_i32_29 = arith.constant 1 : i32
    %66 = tpu.dynamic_rotate %65 by %c1_i32_29 dim 0 : vector<32x128xf32>, i32 -> vector<32x128xf32>
    %67 = vector.broadcast %1 : vector<32x1xf32> to vector<32x128xf32>
    %68 = arith.mulf %66, %67 : vector<32x128xf32>
    %c31_i32_30 = arith.constant 31 : i32
    %69 = tpu.dynamic_rotate %65 by %c31_i32_30 dim 0 : vector<32x128xf32>, i32 -> vector<32x128xf32>
    %70 = vector.broadcast %2 : vector<32x1xf32> to vector<32x128xf32>
    %71 = arith.mulf %69, %70 : vector<32x128xf32>
    %72 = tpu.concatenate %68, %65, %71 in 1 : vector<32x128xf32>, vector<32x128xf32>, vector<32x128xf32> -> vector<32x384xf32>
    %73 = arith.truncf %72 : vector<32x384xf32> to vector<32x384xbf16>
    %c0_31 = arith.constant 0 : index
    %c0_32 = arith.constant 0 : index
    %74 = vector.load %arg5[%c0_31, %c0_32] : memref<384x128xbf16, #tpu.memory_space<vmem>>, vector<384x128xbf16>
    %cst_33 = arith.constant dense<0.000000e+00> : vector<32x128xf32>
    %75 = tpu.matmul %73, %74, %cst_33 {dimension_numbers = #tpu.dot_dimension_numbers<[1], [0], [0], [1], [0, 0, 1, 1], [], []>} : vector<32x384xbf16>, vector<384x128xbf16>, vector<32x128xf32> -> vector<32x128xf32>
    %cst_34 = arith.constant dense<0.000000e+00> : vector<128xf32>
    %76 = vector.multi_reduction <add>, %75, %cst_34 [0] : vector<32x128xf32> to vector<128xf32>
    %77 = vector.shape_cast %76 : vector<128xf32> to vector<1x128xf32>
    %c8_i32_35 = arith.constant 8 : i32
    %78 = tpu.dynamic_rotate %77 by %c8_i32_35 dim 1 : vector<1x128xf32>, i32 -> vector<1x128xf32>
    %79 = arith.addf %77, %78 : vector<1x128xf32>
    %c16_i32_36 = arith.constant 16 : i32
    %80 = tpu.dynamic_rotate %79 by %c16_i32_36 dim 1 : vector<1x128xf32>, i32 -> vector<1x128xf32>
    %81 = arith.addf %79, %80 : vector<1x128xf32>
    %c32_i32_37 = arith.constant 32 : i32
    %82 = tpu.dynamic_rotate %81 by %c32_i32_37 dim 1 : vector<1x128xf32>, i32 -> vector<1x128xf32>
    %83 = arith.addf %81, %82 : vector<1x128xf32>
    %c64_i32_38 = arith.constant 64 : i32
    %84 = tpu.dynamic_rotate %83 by %c64_i32_38 dim 1 : vector<1x128xf32>, i32 -> vector<1x128xf32>
    %85 = arith.addf %83, %84 : vector<1x128xf32>
    %86 = arith.mulf %75, %75 : vector<32x128xf32>
    %cst_39 = arith.constant dense<0.000000e+00> : vector<128xf32>
    %87 = vector.multi_reduction <add>, %86, %cst_39 [0] : vector<32x128xf32> to vector<128xf32>
    %88 = vector.shape_cast %87 : vector<128xf32> to vector<1x128xf32>
    %c8_i32_40 = arith.constant 8 : i32
    %89 = tpu.dynamic_rotate %88 by %c8_i32_40 dim 1 : vector<1x128xf32>, i32 -> vector<1x128xf32>
    %90 = arith.addf %88, %89 : vector<1x128xf32>
    %c16_i32_41 = arith.constant 16 : i32
    %91 = tpu.dynamic_rotate %90 by %c16_i32_41 dim 1 : vector<1x128xf32>, i32 -> vector<1x128xf32>
    %92 = arith.addf %90, %91 : vector<1x128xf32>
    %c32_i32_42 = arith.constant 32 : i32
    %93 = tpu.dynamic_rotate %92 by %c32_i32_42 dim 1 : vector<1x128xf32>, i32 -> vector<1x128xf32>
    %94 = arith.addf %92, %93 : vector<1x128xf32>
    %c64_i32_43 = arith.constant 64 : i32
    %95 = tpu.dynamic_rotate %94 by %c64_i32_43 dim 1 : vector<1x128xf32>, i32 -> vector<1x128xf32>
    %96 = arith.addf %94, %95 : vector<1x128xf32>
    %cst_44 = arith.constant 5.120000e+02 : f32
    %97 = vector.broadcast %cst_44 : f32 to vector<1x128xf32>
    %98 = arith.divf %85, %97 : vector<1x128xf32>
    %cst_45 = arith.constant 5.120000e+02 : f32
    %99 = vector.broadcast %cst_45 : f32 to vector<1x128xf32>
    %100 = arith.divf %96, %99 : vector<1x128xf32>
    %101 = arith.mulf %98, %98 : vector<1x128xf32>
    %102 = arith.subf %100, %101 : vector<1x128xf32>
    %cst_46 = arith.constant 0.000000e+00 : f32
    %103 = vector.broadcast %cst_46 : f32 to vector<1x128xf32>
    %104 = arith.maximumf %102, %103 : vector<1x128xf32>
    %c0_47 = arith.constant 0 : index
    %c0_48 = arith.constant 0 : index
    %105 = vector.load %arg8[%c0_47, %c0_48] : memref<1x128xf32, #tpu.memory_space<vmem>>, vector<1x128xf32>
    %cst_49 = arith.constant 9.99999974E-6 : f32
    %106 = vector.broadcast %cst_49 : f32 to vector<1x128xf32>
    %107 = arith.addf %104, %106 : vector<1x128xf32>
    %108 = math.rsqrt %107 : vector<1x128xf32>
    %109 = arith.mulf %105, %108 : vector<1x128xf32>
    %c0_50 = arith.constant 0 : index
    %c0_51 = arith.constant 0 : index
    %110 = vector.load %arg9[%c0_50, %c0_51] : memref<1x128xf32, #tpu.memory_space<vmem>>, vector<1x128xf32>
    %111 = arith.mulf %98, %109 : vector<1x128xf32>
    %112 = arith.subf %110, %111 : vector<1x128xf32>
    %113 = vector.broadcast %109 : vector<1x128xf32> to vector<32x128xf32>
    %114 = arith.mulf %75, %113 : vector<32x128xf32>
    %115 = vector.broadcast %112 : vector<1x128xf32> to vector<32x128xf32>
    %116 = arith.addf %114, %115 : vector<32x128xf32>
    %cst_52 = arith.constant 0.000000e+00 : f32
    %117 = vector.broadcast %cst_52 : f32 to vector<32x128xf32>
    %118 = arith.maximumf %116, %117 : vector<32x128xf32>
    %c0_53 = arith.constant 0 : index
    %c0_54 = arith.constant 0 : index
    %119 = vector.load %arg10[%c0_53, %c0_54] : memref<32x128xf32, #tpu.memory_space<vmem>>, vector<32x128xf32>
    tpu.vector_store %arg10[%c0_53, %c0_54], %118 {strides = array<i32>} : memref<32x128xf32, #tpu.memory_space<vmem>>, vector<32x128xf32>,
    return
  }
  func.func @transform_0(%arg0: i32) -> (i32, i32) {
    %c0_i32 = arith.constant 0 : i32
    %c0_i32_0 = arith.constant 0 : i32
    %c0_i32_1 = arith.constant 0 : i32
    return %c0_i32, %c0_i32_0 : i32, i32
  }
  func.func @transform_1(%arg0: i32) -> (i32, i32) {
    %c0_i32 = arith.constant 0 : i32
    %c0_i32_0 = arith.constant 0 : i32
    %c0_i32_1 = arith.constant 0 : i32
    return %c0_i32, %c0_i32_0 : i32, i32
  }
  func.func @transform_2(%arg0: i32) -> (i32, i32) {
    %c0_i32 = arith.constant 0 : i32
    %c0_i32_0 = arith.constant 0 : i32
    %c0_i32_1 = arith.constant 0 : i32
    return %c0_i32, %c0_i32_0 : i32, i32
  }
  func.func @transform_3(%arg0: i32) -> (i32, i32, i32) {
    %c0_i32 = arith.constant 0 : i32
    %c0_i32_0 = arith.constant 0 : i32
    %c0_i32_1 = arith.constant 0 : i32
    %c0_i32_2 = arith.constant 0 : i32
    return %c0_i32, %c0_i32_0, %c0_i32_1 : i32, i32, i32
  }
  func.func @transform_4(%arg0: i32) -> (i32, i32) {
    %c0_i32 = arith.constant 0 : i32
    %c0_i32_0 = arith.constant 0 : i32
    %c0_i32_1 = arith.constant 0 : i32
    return %c0_i32, %c0_i32_0 : i32, i32
  }
  func.func @transform_5(%arg0: i32) -> (i32, i32) {
    %c0_i32 = arith.constant 0 : i32
    %c0_i32_0 = arith.constant 0 : i32
    %c0_i32_1 = arith.constant 0 : i32
    return %c0_i32, %c0_i32_0 : i32, i32
  }
  func.func @transform_6(%arg0: i32) -> (i32, i32) {
    %c0_i32 = arith.constant 0 : i32
    %c0_i32_0 = arith.constant 0 : i32
    %c0_i32_1 = arith.constant 0 : i32
    return %c0_i32, %c0_i32_0 : i32, i32
  }
  func.func @transform_7(%arg0: i32) -> (i32, i32) {
    %c0_i32 = arith.constant 0 : i32
    %c0_i32_0 = arith.constant 0 : i32
    %c0_i32_1 = arith.constant 0 : i32
    return %c0_i32, %c0_i32_0 : i32, i32
  }
  func.func @transform_8(%arg0: i32) -> (i32, i32) {
    %c0_i32 = arith.constant 0 : i32
    %c0_i32_0 = arith.constant 0 : i32
    %c0_i32_1 = arith.constant 0 : i32
    return %c0_i32, %c0_i32_0 : i32, i32
  }
  func.func @transform_9(%arg0: i32) -> (i32, i32) {
    %c0_i32 = arith.constant 0 : i32
    %c0_i32_0 = arith.constant 0 : i32
    %c0_i32_1 = arith.constant 0 : i32
    return %c0_i32, %c0_i32_0 : i32, i32
  }
}

</mosaic_0001>

<llo_original>
// kernel: double_conv_forward.1
$region0: #{double_conv_forward.1}
  #allocation0 [shape = 'u32[]', space=smem, size = 0x4, offset = 0x4, fixed_abs, tag = 'smem constant byte address 0x4 - core index']
  #allocation1 [shape = 'u32[144,128]{1,0:T(1,128)}', space=vmem, size = 0x12000, scoped, tag = 'internal scratch']
  %s0 = inlined_call_operand.vmem [shape: f32[32,64], index: 0, kind: input, shape index: {}]
  %s1 = inlined_call_operand.vmem [shape: f32[32,1], index: 1, kind: input, shape index: {}]
  %s2 = inlined_call_operand.vmem [shape: f32[32,1], index: 2, kind: input, shape index: {}]
  %s3 = inlined_call_operand.vmem [shape: bf16[3,64,128], index: 3, kind: input, shape index: {}]
  %s4 = inlined_call_operand.vmem [shape: bf16[384,128], index: 4, kind: input, shape index: {}]
  %s5 = inlined_call_operand.vmem [shape: f32[1,128], index: 5, kind: input, shape index: {}]
  %s6 = inlined_call_operand.vmem [shape: f32[1,128], index: 6, kind: input, shape index: {}]
  %s7 = inlined_call_operand.vmem [shape: f32[1,128], index: 7, kind: input, shape index: {}]
  %s8 = inlined_call_operand.vmem [shape: f32[1,128], index: 8, kind: input, shape index: {}]
  %s9 = inlined_call_operand.vmem [shape: f32[32,128], index: 9, kind: output, shape index: {}]
  %s10 = sld [smem:[#allocation0]]
  $region46: #{double_conv_forward.1} parent=0
    _
  %s12 = ssub.s32 1, %s10
  %s13 = scalar_select 0, %s12, %s10
  // Predicated region
  $region2: #{double_conv_forward.1} parent=0 // pred_check
    _
  $region3: #{double_conv_forward.1} parent=0 // pred_check_branch
    %15 = sbr.rel (0) target = $region5
  $region4: #{double_conv_forward.1} parent=0 // pred_region
    _
  $region5: #{double_conv_forward.1} parent=0 // pred_fallthru
    _
  // Predicated region
  $region6: #{double_conv_forward.1} parent=0 // pred_check
    _
  $region7: #{double_conv_forward.1} parent=0 // pred_check_branch
    %17 = sbr.rel (0) target = $region9
  $region8: #{double_conv_forward.1} parent=0 // pred_region
    _
  $region9: #{double_conv_forward.1} parent=0 // pred_fallthru
    _
  // Predicated region
  $region10: #{double_conv_forward.1} parent=0 // pred_check
    _
  $region11: #{double_conv_forward.1} parent=0 // pred_check_branch
    %19 = sbr.rel (0) target = $region13
  $region12: #{double_conv_forward.1} parent=0 // pred_region
    _
  $region13: #{double_conv_forward.1} parent=0 // pred_fallthru
    _
  // Predicated region
  $region14: #{double_conv_forward.1} parent=0 // pred_check
    _
  $region15: #{double_conv_forward.1} parent=0 // pred_check_branch
    %21 = sbr.rel (0) target = $region17
  $region16: #{double_conv_forward.1} parent=0 // pred_region
    _
  $region17: #{double_conv_forward.1} parent=0 // pred_fallthru
    _
  // Predicated region
  $region18: #{double_conv_forward.1} parent=0 // pred_check
    _
  $region19: #{double_conv_forward.1} parent=0 // pred_check_branch
    %23 = sbr.rel (0) target = $region21
  $region20: #{double_conv_forward.1} parent=0 // pred_region
    _
  $region21: #{double_conv_forward.1} parent=0 // pred_fallthru
    _
  // Predicated region
  $region22: #{double_conv_forward.1} parent=0 // pred_check
    _
  $region23: #{double_conv_forward.1} parent=0 // pred_check_branch
    %25 = sbr.rel (0) target = $region25
  $region24: #{double_conv_forward.1} parent=0 // pred_region
    _
  $region25: #{double_conv_forward.1} parent=0 // pred_fallthru
    _
  // Predicated region
  $region26: #{double_conv_forward.1} parent=0 // pred_check
    _
  $region27: #{double_conv_forward.1} parent=0 // pred_check_branch
    %27 = sbr.rel (0) target = $region29
  $region28: #{double_conv_forward.1} parent=0 // pred_region
    _
  $region29: #{double_conv_forward.1} parent=0 // pred_fallthru
    _
  // Predicated region
  $region30: #{double_conv_forward.1} parent=0 // pred_check
    _
  $region31: #{double_conv_forward.1} parent=0 // pred_check_branch
    %29 = sbr.rel (0) target = $region33
  $region32: #{double_conv_forward.1} parent=0 // pred_region
    _
  $region33: #{double_conv_forward.1} parent=0 // pred_fallthru
    _
  // Predicated region
  $region34: #{double_conv_forward.1} parent=0 // pred_check
    _
  $region35: #{double_conv_forward.1} parent=0 // pred_check_branch
    %31 = sbr.rel (0) target = $region37
  $region36: #{double_conv_forward.1} parent=0 // pred_region
    _
  $region37: #{double_conv_forward.1} parent=0 // pred_fallthru
    _
  %v33 = vld [vmem:[%s0] sm:$0xff]
  %v34 = vld [vmem:[%s0 + $0x8] sm:$0xff]
  %v35 = vld [vmem:[%s0 + $0x10] sm:$0xff]
  %v36 = vld [vmem:[%s0 + $0x18] sm:$0xff]
  %v37 = vld [vmem:[%s1] sm:$0xff]
  %v38 = vld [vmem:[%s1 + $0x8] sm:$0xff]
  %v39 = vld [vmem:[%s1 + $0x10] sm:$0xff]
  %v40 = vld [vmem:[%s1 + $0x18] sm:$0xff]
  %v41 = vld [vmem:[%s2] sm:$0xff]
  %v42 = vld [vmem:[%s2 + $0x8] sm:$0xff]
  %v43 = vld [vmem:[%s2 + $0x10] sm:$0xff]
  %v44 = vld [vmem:[%s2 + $0x18] sm:$0xff]
  %v45 = vrot.slane %v33, 7
  %v46 = vrot.slane %v34, 7
  %v47 = vrot.slane %v35, 7
  %v48 = vrot.slane %v36, 7
  %v49 = vlaneseq
  %v50 = vshrl.u32 %v49, 7
  %vm51 = vcmp.lt.s32.totalorder %v50, 1
  %v52 = vsel %vm51, %v47, %v48
  %v53 = vsel %vm51, %v46, %v47
  %v54 = vsel %vm51, %v45, %v46
  %v55 = vsel %vm51, %v48, %v45
  %57 = vset.pattern.permute.xlu0 0
  %58 = vperm.xlu0 %57, %v37
  %v59 = vpop.permute.xlu0 %58
  %62 = vset.pattern.permute.xlu0 0
  %63 = vperm.xlu0 %62, %v38
  %v64 = vpop.permute.xlu0 %63
  %67 = vset.pattern.permute.xlu0 0
  %68 = vperm.xlu0 %67, %v39
  %v69 = vpop.permute.xlu0 %68
  %72 = vset.pattern.permute.xlu0 0
  %73 = vperm.xlu0 %72, %v40
  %v74 = vpop.permute.xlu0 %73
  %v76 = vmul.f32 %v55, %v59
  %v77 = vmul.f32 %v54, %v64
  %v78 = vmul.f32 %v53, %v69
  %v79 = vmul.f32 %v52, %v74
  %v80 = vrot.slane %v33, 1
  %v81 = vrot.slane %v34, 1
  %v82 = vrot.slane %v35, 1
  %v83 = vrot.slane %v36, 1
  %vm84 = vcmp.lt.s32.totalorder %v50, 7
  %v85 = vsel %vm84, %v82, %v83
  %v86 = vsel %vm84, %v81, %v82
  %v87 = vsel %vm84, %v80, %v81
  %v88 = vsel %vm84, %v83, %v80
  %90 = vset.pattern.permute.xlu0 0
  %91 = vperm.xlu0 %90, %v41
  %v92 = vpop.permute.xlu0 %91
  %95 = vset.pattern.permute.xlu0 0
  %96 = vperm.xlu0 %95, %v42
  %v97 = vpop.permute.xlu0 %96
  %100 = vset.pattern.permute.xlu0 0
  %101 = vperm.xlu0 %100, %v43
  %v102 = vpop.permute.xlu0 %101
  %105 = vset.pattern.permute.xlu0 0
  %106 = vperm.xlu0 %105, %v44
  %v107 = vpop.permute.xlu0 %106
  %v109 = vmul.f32 %v87, %v92
  %v110 = vmul.f32 %v86, %v97
  %v111 = vmul.f32 %v85, %v102
  %v112 = vmul.f32 %v88, %v107
  %v113 = vpack.c.bf16 %v77, %v76
  %v114 = vpack.c.bf16 %v79, %v78
  %v115 = vld [vmem:[%s3] sm:$0xf]
  %v116 = vld [vmem:[%s3 + $0x4] sm:$0xf]
  %v117 = vld [vmem:[%s3 + $0x8] sm:$0xf]
  %v118 = vld [vmem:[%s3 + $0xc] sm:$0xf]
  %v119 = vld [vmem:[%s3 + $0x10] sm:$0xf]
  %v120 = vld [vmem:[%s3 + $0x14] sm:$0xf]
  %v121 = vld [vmem:[%s3 + $0x18] sm:$0xf]
  %v122 = vld [vmem:[%s3 + $0x1c] sm:$0xf]
  %v123 = vpack.c.bf16 %v34, %v33
  %v124 = vpack.c.bf16 %v36, %v35
  %s125 = scalar_lea.vmem %s3, 32
  %v126 = vld [vmem:[%s125] sm:$0xf]
  %v127 = vld [vmem:[%s125 + $0x4] sm:$0xf]
  %v128 = vld [vmem:[%s125 + $0x8] sm:$0xf]
  %v129 = vld [vmem:[%s125 + $0xc] sm:$0xf]
  %v130 = vld [vmem:[%s125 + $0x10] sm:$0xf]
  %v131 = vld [vmem:[%s125 + $0x14] sm:$0xf]
  %v132 = vld [vmem:[%s125 + $0x18] sm:$0xf]
  %v133 = vld [vmem:[%s125 + $0x1c] sm:$0xf]
  %v142 = vunpack.c.l.b16 %v126
  %v143 = vunpack.c.l.b16 %v127
  %v144 = vunpack.c.l.b16 %v128
  %v145 = vunpack.c.l.b16 %v129
  %v146 = vunpack.c.l.b16 %v130
  %v147 = vunpack.c.l.b16 %v131
  %v148 = vunpack.c.l.b16 %v132
  %v149 = vunpack.c.l.b16 %v133
  %v150 = vpack.c.b16 %v143, %v142
  %v151 = vpack.c.b16 %v145, %v144
  %v152 = vpack.c.b16 %v147, %v146
  %v153 = vpack.c.b16 %v149, %v148
  %vm158 = vcmask 523264
  %v160 = vsel %vm158, %v123, 0
  %v163 = vsel %vm158, %v124, 0
  %165 = vmatprep.subr.bf16.mxu0 0
  %166 = vmatpush1.bf16.msra.mxu0 %v150
  %167 = vmatprep.subr.bf16.mxu0 0
  %168 = vmatpush1.bf16.msra.mxu0 %v151
  %169 = vmatprep.subr.bf16.mxu0 0
  %170 = vmatpush1.bf16.msra.mxu0 %v152
  %171 = vmatprep.subr.bf16.mxu0 0
  %172 = vmatpush1.bf16.msra.mxu0 %v153
  %173 = vmatprep.subr.bf16.mxu0 0
  %174 = vmatpush1.bf16.msra.mxu0 0
  %175 = vmatprep.subr.bf16.mxu0 0
  %176 = vmatpush1.bf16.msra.mxu0 0
  %177 = vmatprep.subr.bf16.mxu0 0
  %178 = vmatpush1.bf16.msra.mxu0 0
  %179 = vmatprep.subr.bf16.mxu0 0
  %180 = vmatpush1.bf16.msra.mxu0 0
  %181 = vmatprep.subr.bf16.mxu0 0
  %182 = vmatpush1.bf16.msra.mxu0 0
  %183 = vmatprep.subr.bf16.mxu0 0
  %184 = vmatpush1.bf16.msra.mxu0 0
  %185 = vmatprep.subr.bf16.mxu0 0
  %186 = vmatpush1.bf16.msra.mxu0 0
  %187 = vmatprep.subr.bf16.mxu0 0
  %188 = vmatpush1.bf16.msra.mxu0 0
  %189 = vmatprep.subr.bf16.mxu0 0
  %190 = vmatpush1.bf16.msra.mxu0 0
  %191 = vmatprep.subr.bf16.mxu0 0
  %192 = vmatpush1.bf16.msra.mxu0 0
  %193 = vmatprep.subr.bf16.mxu0 0
  %194 = vmatpush1.bf16.msra.mxu0 0
  %195 = vmatprep.subr.bf16.mxu0 0
  %196 = vmatpush1.bf16.msra.mxu0 0
  %197 = vmatprep.mubr.bf16.mxu0 0
  %198 = vmatmul.mubr.bf16.gmra.mrb[0].mxu0 %v160
  %v199 = vpop.f32.mrb[0].mxu0
  %v200 = vadd.f32 0.0, %v199
  %v201 = vpop.f32.mrb[0].mxu0
  %v202 = vpop.f32.mrb[0].mxu0
  %v203 = vadd.f32 0.0, %v202
  %v204 = vpop.f32.mrb[0].mxu0
  %205 = vmatprep.mubr.bf16.mxu0 0
  %206 = vmatmul.mubr.bf16.gmra.mrb[0].mxu0 %v163
  %v207 = vpop.f32.mrb[0].mxu0
  %v208 = vadd.f32 0.0, %v207
  %v209 = vpop.f32.mrb[0].mxu0
  %v210 = vpop.f32.mrb[0].mxu0
  %v211 = vadd.f32 0.0, %v210
  %v212 = vpop.f32.mrb[0].mxu0
  %213 = vdwg.mxu0
  %v222 = vunpack.c.l.b16 %v115
  %v223 = vunpack.c.l.b16 %v116
  %v224 = vunpack.c.l.b16 %v117
  %v225 = vunpack.c.l.b16 %v118
  %v226 = vunpack.c.l.b16 %v119
  %v227 = vunpack.c.l.b16 %v120
  %v228 = vunpack.c.l.b16 %v121
  %v229 = vunpack.c.l.b16 %v122
  %v230 = vpack.c.b16 %v223, %v222
  %v231 = vpack.c.b16 %v225, %v224
  %v232 = vpack.c.b16 %v227, %v226
  %v233 = vpack.c.b16 %v229, %v228
  %v239 = vsel %vm158, %v113, 0
  %v242 = vsel %vm158, %v114, 0
  %244 = vmatprep.subr.bf16.mxu0 0
  %245 = vmatpush1.bf16.msra.mxu0 %v230
  %246 = vmatprep.subr.bf16.mxu0 0
  %247 = vmatpush1.bf16.msra.mxu0 %v231
  %248 = vmatprep.subr.bf16.mxu0 0
  %249 = vmatpush1.bf16.msra.mxu0 %v232
  %250 = vmatprep.subr.bf16.mxu0 0
  %251 = vmatpush1.bf16.msra.mxu0 %v233
  %252 = vmatprep.subr.bf16.mxu0 0
  %253 = vmatpush1.bf16.msra.mxu0 0
  %254 = vmatprep.subr.bf16.mxu0 0
  %255 = vmatpush1.bf16.msra.mxu0 0
  %256 = vmatprep.subr.bf16.mxu0 0
  %257 = vmatpush1.bf16.msra.mxu0 0
  %258 = vmatprep.subr.bf16.mxu0 0
  %259 = vmatpush1.bf16.msra.mxu0 0
  %260 = vmatprep.subr.bf16.mxu0 0
  %261 = vmatpush1.bf16.msra.mxu0 0
  %262 = vmatprep.subr.bf16.mxu0 0
  %263 = vmatpush1.bf16.msra.mxu0 0
  %264 = vmatprep.subr.bf16.mxu0 0
  %265 = vmatpush1.bf16.msra.mxu0 0
  %266 = vmatprep.subr.bf16.mxu0 0
  %267 = vmatpush1.bf16.msra.mxu0 0
  %268 = vmatprep.subr.bf16.mxu0 0
  %269 = vmatpush1.bf16.msra.mxu0 0
  %270 = vmatprep.subr.bf16.mxu0 0
  %271 = vmatpush1.bf16.msra.mxu0 0
  %272 = vmatprep.subr.bf16.mxu0 0
  %273 = vmatpush1.bf16.msra.mxu0 0
  %274 = vmatprep.subr.bf16.mxu0 0
  %275 = vmatpush1.bf16.msra.mxu0 0
  %276 = vmatprep.mubr.bf16.mxu0 0
  %277 = vmatmul.mubr.bf16.gmra.mrb[0].mxu0 %v239
  %v278 = vpop.f32.mrb[0].mxu0
  %v279 = vadd.f32 %v200, %v278
  %v280 = vpop.f32.mrb[0].mxu0
  %v281 = vpop.f32.mrb[0].mxu0
  %v282 = vadd.f32 %v203, %v281
  %v283 = vpop.f32.mrb[0].mxu0
  %284 = vmatprep.mubr.bf16.mxu0 0
  %285 = vmatmul.mubr.bf16.gmra.mrb[0].mxu0 %v242
  %v286 = vpop.f32.mrb[0].mxu0
  %v287 = vadd.f32 %v208, %v286
  %v288 = vpop.f32.mrb[0].mxu0
  %v289 = vpop.f32.mrb[0].mxu0
  %v290 = vadd.f32 %v211, %v289
  %v291 = vpop.f32.mrb[0].mxu0
  %292 = vdwg.mxu0
  %v293 = vpack.c.bf16 %v110, %v109
  %v294 = vpack.c.bf16 %v112, %v111
  %s295 = scalar_lea.vmem %s3, 64
  %v296 = vld [vmem:[%s295] sm:$0xf]
  %v297 = vld [vmem:[%s295 + $0x4] sm:$0xf]
  %v298 = vld [vmem:[%s295 + $0x8] sm:$0xf]
  %v299 = vld [vmem:[%s295 + $0xc] sm:$0xf]
  %v300 = vld [vmem:[%s295 + $0x10] sm:$0xf]
  %v301 = vld [vmem:[%s295 + $0x14] sm:$0xf]
  %v302 = vld [vmem:[%s295 + $0x18] sm:$0xf]
  %v303 = vld [vmem:[%s295 + $0x1c] sm:$0xf]
  %v312 = vunpack.c.l.b16 %v296
  %v313 = vunpack.c.l.b16 %v297
  %v314 = vunpack.c.l.b16 %v298
  %v315 = vunpack.c.l.b16 %v299
  %v316 = vunpack.c.l.b16 %v300
  %v317 = vunpack.c.l.b16 %v301
  %v318 = vunpack.c.l.b16 %v302
  %v319 = vunpack.c.l.b16 %v303
  %v320 = vpack.c.b16 %v313, %v312
  %v321 = vpack.c.b16 %v315, %v314
  %v322 = vpack.c.b16 %v317, %v316
  %v323 = vpack.c.b16 %v319, %v318
  %v329 = vsel %vm158, %v293, 0
  %v332 = vsel %vm158, %v294, 0
  %334 = vmatprep.subr.bf16.mxu0 0
  %335 = vmatpush1.bf16.msra.mxu0 %v320
  %336 = vmatprep.subr.bf16.mxu0 0
  %337 = vmatpush1.bf16.msra.mxu0 %v321
  %338 = vmatprep.subr.bf16.mxu0 0
  %339 = vmatpush1.bf16.msra.mxu0 %v322
  %340 = vmatprep.subr.bf16.mxu0 0
  %341 = vmatpush1.bf16.msra.mxu0 %v323
  %342 = vmatprep.subr.bf16.mxu0 0
  %343 = vmatpush1.bf16.msra.mxu0 0
  %344 = vmatprep.subr.bf16.mxu0 0
  %345 = vmatpush1.bf16.msra.mxu0 0
  %346 = vmatprep.subr.bf16.mxu0 0
  %347 = vmatpush1.bf16.msra.mxu0 0
  %348 = vmatprep.subr.bf16.mxu0 0
  %349 = vmatpush1.bf16.msra.mxu0 0
  %350 = vmatprep.subr.bf16.mxu0 0
  %351 = vmatpush1.bf16.msra.mxu0 0
  %352 = vmatprep.subr.bf16.mxu0 0
  %353 = vmatpush1.bf16.msra.mxu0 0
  %354 = vmatprep.subr.bf16.mxu0 0
  %355 = vmatpush1.bf16.msra.mxu0 0
  %356 = vmatprep.subr.bf16.mxu0 0
  %357 = vmatpush1.bf16.msra.mxu0 0
  %358 = vmatprep.subr.bf16.mxu0 0
  %359 = vmatpush1.bf16.msra.mxu0 0
  %360 = vmatprep.subr.bf16.mxu0 0
  %361 = vmatpush1.bf16.msra.mxu0 0
  %362 = vmatprep.subr.bf16.mxu0 0
  %363 = vmatpush1.bf16.msra.mxu0 0
  %364 = vmatprep.subr.bf16.mxu0 0
  %365 = vmatpush1.bf16.msra.mxu0 0
  %366 = vmatprep.mubr.bf16.mxu0 0
  %367 = vmatmul.mubr.bf16.gmra.mrb[0].mxu0 %v329
  %v368 = vpop.f32.mrb[0].mxu0
  %v369 = vadd.f32 0.0, %v368
  %v370 = vpop.f32.mrb[0].mxu0
  %v371 = vpop.f32.mrb[0].mxu0
  %v372 = vadd.f32 0.0, %v371
  %v373 = vpop.f32.mrb[0].mxu0
  %374 = vmatprep.mubr.bf16.mxu0 0
  %375 = vmatmul.mubr.bf16.gmra.mrb[0].mxu0 %v332
  %v376 = vpop.f32.mrb[0].mxu0
  %v377 = vadd.f32 0.0, %v376
  %v378 = vpop.f32.mrb[0].mxu0
  %v379 = vpop.f32.mrb[0].mxu0
  %v380 = vadd.f32 0.0, %v379
  %v381 = vpop.f32.mrb[0].mxu0
  %382 = vdwg.mxu0
  %v383 = vadd.f32 %v279, %v369
  %v384 = vadd.f32 %v282, %v372
  %v385 = vadd.f32 %v287, %v377
  %v386 = vadd.f32 %v290, %v380
  %v387 = vadd.f32 %v383, %v384
  %v388 = vadd.f32 %v387, %v385
  %v389 = vadd.f32 %v388, %v386
  %v390 = vrot.slane %v389, 4
  %v391 = vadd.f32 %v389, %v390
  %v392 = vrot.slane %v391, 2
  %v393 = vadd.f32 %v391, %v392
  %v394 = vrot.slane %v393, 1
  %v395 = vadd.f32 %v393, %v394
  %396 = vrot.lane.b32.xlu0 %v395, 8
  %v397 = vpop.permute.xlu0 %396
  %v398 = vadd.f32 %v395, %v397
  %399 = vrot.lane.b32.xlu0 %v398, 16
  %v400 = vpop.permute.xlu0 %399
  %v401 = vadd.f32 %v398, %v400
  %402 = vrot.lane.b32.xlu0 %v401, 32
  %v403 = vpop.permute.xlu0 %402
  %v404 = vadd.f32 %v401, %v403
  %405 = vrot.lane.b32.xlu0 %v404, 64
  %v406 = vpop.permute.xlu0 %405
  %v407 = vadd.f32 %v404, %v406
  %v408 = vmul.f32 %v383, %v383
  %v409 = vmul.f32 %v384, %v384
  %v410 = vmul.f32 %v385, %v385
  %v411 = vmul.f32 %v386, %v386
  %v412 = vadd.f32 %v408, %v409
  %v413 = vadd.f32 %v412, %v410
  %v414 = vadd.f32 %v413, %v411
  %v415 = vrot.slane %v414, 4
  %v416 = vadd.f32 %v414, %v415
  %v417 = vrot.slane %v416, 2
  %v418 = vadd.f32 %v416, %v417
  %v419 = vrot.slane %v418, 1
  %v420 = vadd.f32 %v418, %v419
  %421 = vrot.lane.b32.xlu0 %v420, 8
  %v422 = vpop.permute.xlu0 %421
  %v423 = vadd.f32 %v420, %v422
  %424 = vrot.lane.b32.xlu0 %v423, 16
  %v425 = vpop.permute.xlu0 %424
  %v426 = vadd.f32 %v423, %v425
  %427 = vrot.lane.b32.xlu0 %v426, 32
  %v428 = vpop.permute.xlu0 %427
  %v429 = vadd.f32 %v426, %v428
  %430 = vrot.lane.b32.xlu0 %v429, 64
  %v431 = vpop.permute.xlu0 %430
  %v432 = vadd.f32 %v429, %v431
  %v433 = vrcp.pop 512.0
  %v434 = vmul.f32 %v407, %v433
  %v435 = vmul.f32 %v432, %v433
  %v436 = vmul.f32 %v434, %v434
  %v437 = vsub.f32 %v435, %v436
  %v438 = vmax.f32 %v437, 0.0
  %v439 = vld [vmem:[%s5] sm:$0x1]
  %v440 = vadd.f32 %v438, 1e-05
  %v441 = vrsqrt.pop %v440
  %v442 = vmul.f32 %v439, %v441
  %v443 = vld [vmem:[%s6] sm:$0x1]
  %v444 = vmul.f32 %v434, %v442
  %v445 = vsub.f32 %v443, %v444
  %v447 = vlaneseq
  %v448 = vshrl.u32 %v447, 7
  %v449 = vsub.s32 0, %v448
  %v450 = vrot.slane %v442, %v449
  %v452 = vmul.f32 %v383, %v450
  %v453 = vmul.f32 %v384, %v450
  %v454 = vmul.f32 %v385, %v450
  %v455 = vmul.f32 %v386, %v450
  %v457 = vlaneseq
  %v458 = vshrl.u32 %v457, 7
  %v459 = vsub.s32 0, %v458
  %v460 = vrot.slane %v445, %v459
  %v462 = vadd.f32 %v452, %v460
  %v463 = vadd.f32 %v453, %v460
  %v464 = vadd.f32 %v454, %v460
  %v465 = vadd.f32 %v455, %v460
  %v466 = vmax.f32 %v462, 0.0
  %v467 = vmax.f32 %v463, 0.0
  %v468 = vmax.f32 %v464, 0.0
  %v469 = vmax.f32 %v465, 0.0
  %v470 = vrot.slane %v466, 7
  %v471 = vrot.slane %v467, 7
  %v472 = vrot.slane %v468, 7
  %v473 = vrot.slane %v469, 7
  %v474 = vsel %vm51, %v472, %v473
  %v475 = vsel %vm51, %v471, %v472
  %v476 = vsel %vm51, %v470, %v471
  %v477 = vsel %vm51, %v473, %v470
  %v478 = vmul.f32 %v477, %v59
  %v479 = vmul.f32 %v476, %v64
  %v480 = vmul.f32 %v475, %v69
  %v481 = vmul.f32 %v474, %v74
  %v482 = vrot.slane %v466, 1
  %v483 = vrot.slane %v467, 1
  %v484 = vrot.slane %v468, 1
  %v485 = vrot.slane %v469, 1
  %v486 = vsel %vm84, %v484, %v485
  %v487 = vsel %vm84, %v483, %v484
  %v488 = vsel %vm84, %v482, %v483
  %v489 = vsel %vm84, %v485, %v482
  %v490 = vmul.f32 %v488, %v92
  %v491 = vmul.f32 %v487, %v97
  %v492 = vmul.f32 %v486, %v102
  %v493 = vmul.f32 %v489, %v107
  %v494 = vpack.c.bf16 %v479, %v478
  %v495 = vpack.c.bf16 %v467, %v466
  %v496 = vpack.c.bf16 %v491, %v490
  %v497 = vpack.c.bf16 %v481, %v480
  %v498 = vpack.c.bf16 %v469, %v468
  %v499 = vpack.c.bf16 %v493, %v492
  %v500 = vld [vmem:[%s4] sm:$0xf]
  %v501 = vld [vmem:[%s4 + $0x4] sm:$0xf]
  %v502 = vld [vmem:[%s4 + $0x8] sm:$0xf]
  %v503 = vld [vmem:[%s4 + $0xc] sm:$0xf]
  %v504 = vld [vmem:[%s4 + $0x10] sm:$0xf]
  %v505 = vld [vmem:[%s4 + $0x14] sm:$0xf]
  %v506 = vld [vmem:[%s4 + $0x18] sm:$0xf]
  %v507 = vld [vmem:[%s4 + $0x1c] sm:$0xf]
  %v508 = vld [vmem:[%s4 + $0x20] sm:$0xf]
  %v509 = vld [vmem:[%s4 + $0x24] sm:$0xf]
  %v510 = vld [vmem:[%s4 + $0x28] sm:$0xf]
  %v511 = vld [vmem:[%s4 + $0x2c] sm:$0xf]
  %v512 = vld [vmem:[%s4 + $0x30] sm:$0xf]
  %v513 = vld [vmem:[%s4 + $0x34] sm:$0xf]
  %v514 = vld [vmem:[%s4 + $0x38] sm:$0xf]
  %v515 = vld [vmem:[%s4 + $0x3c] sm:$0xf]
  %v516 = vld [vmem:[%s4 + $0x40] sm:$0xf]
  %v517 = vld [vmem:[%s4 + $0x44] sm:$0xf]
  %v518 = vld [vmem:[%s4 + $0x48] sm:$0xf]
  %v519 = vld [vmem:[%s4 + $0x4c] sm:$0xf]
  %v520 = vld [vmem:[%s4 + $0x50] sm:$0xf]
  %v521 = vld [vmem:[%s4 + $0x54] sm:$0xf]
  %v522 = vld [vmem:[%s4 + $0x58] sm:$0xf]
  %v523 = vld [vmem:[%s4 + $0x5c] sm:$0xf]
  %v524 = vld [vmem:[%s4 + $0x60] sm:$0xf]
  %v525 = vld [vmem:[%s4 + $0x64] sm:$0xf]
  %v526 = vld [vmem:[%s4 + $0x68] sm:$0xf]
  %v527 = vld [vmem:[%s4 + $0x6c] sm:$0xf]
  %v528 = vld [vmem:[%s4 + $0x70] sm:$0xf]
  %v529 = vld [vmem:[%s4 + $0x74] sm:$0xf]
  %v530 = vld [vmem:[%s4 + $0x78] sm:$0xf]
  %v531 = vld [vmem:[%s4 + $0x7c] sm:$0xf]
  %v532 = vld [vmem:[%s4 + $0x80] sm:$0xf]
  %v533 = vld [vmem:[%s4 + $0x84] sm:$0xf]
  %v534 = vld [vmem:[%s4 + $0x88] sm:$0xf]
  %v535 = vld [vmem:[%s4 + $0x8c] sm:$0xf]
  %v536 = vld [vmem:[%s4 + $0x90] sm:$0xf]
  %v537 = vld [vmem:[%s4 + $0x94] sm:$0xf]
  %v538 = vld [vmem:[%s4 + $0x98] sm:$0xf]
  %v539 = vld [vmem:[%s4 + $0x9c] sm:$0xf]
  %v540 = vld [vmem:[%s4 + $0xa0] sm:$0xf]
  %v541 = vld [vmem:[%s4 + $0xa4] sm:$0xf]
  %v542 = vld [vmem:[%s4 + $0xa8] sm:$0xf]
  %v543 = vld [vmem:[%s4 + $0xac] sm:$0xf]
  %v544 = vld [vmem:[%s4 + $0xb0] sm:$0xf]
  %v545 = vld [vmem:[%s4 + $0xb4] sm:$0xf]
  %v546 = vld [vmem:[%s4 + $0xb8] sm:$0xf]
  %v547 = vld [vmem:[%s4 + $0xbc] sm:$0xf]
  %v596 = vunpack.c.l.b16 %v500
  %v597 = vunpack.c.l.b16 %v501
  %v598 = vunpack.c.l.b16 %v502
  %v599 = vunpack.c.l.b16 %v503
  %v600 = vunpack.c.l.b16 %v504
  %v601 = vunpack.c.l.b16 %v505
  %v602 = vunpack.c.l.b16 %v506
  %v603 = vunpack.c.l.b16 %v507
  %v604 = vunpack.c.l.b16 %v508
  %v605 = vunpack.c.l.b16 %v509
  %v606 = vunpack.c.l.b16 %v510
  %v607 = vunpack.c.l.b16 %v511
  %v608 = vunpack.c.l.b16 %v512
  %v609 = vunpack.c.l.b16 %v513
  %v610 = vunpack.c.l.b16 %v514
  %v611 = vunpack.c.l.b16 %v515
  %v612 = vunpack.c.l.b16 %v516
  %v613 = vunpack.c.l.b16 %v517
  %v614 = vunpack.c.l.b16 %v518
  %v615 = vunpack.c.l.b16 %v519
  %v616 = vunpack.c.l.b16 %v520
  %v617 = vunpack.c.l.b16 %v521
  %v618 = vunpack.c.l.b16 %v522
  %v619 = vunpack.c.l.b16 %v523
  %v620 = vunpack.c.l.b16 %v524
  %v621 = vunpack.c.l.b16 %v525
  %v622 = vunpack.c.l.b16 %v526
  %v623 = vunpack.c.l.b16 %v527
  %v624 = vunpack.c.l.b16 %v528
  %v625 = vunpack.c.l.b16 %v529
  %v626 = vunpack.c.l.b16 %v530
  %v627 = vunpack.c.l.b16 %v531
  %v628 = vunpack.c.l.b16 %v532
  %v629 = vunpack.c.l.b16 %v533
  %v630 = vunpack.c.l.b16 %v534
  %v631 = vunpack.c.l.b16 %v535
  %v632 = vunpack.c.l.b16 %v536
  %v633 = vunpack.c.l.b16 %v537
  %v634 = vunpack.c.l.b16 %v538
  %v635 = vunpack.c.l.b16 %v539
  %v636 = vunpack.c.l.b16 %v540
  %v637 = vunpack.c.l.b16 %v541
  %v638 = vunpack.c.l.b16 %v542
  %v639 = vunpack.c.l.b16 %v543
  %v640 = vunpack.c.l.b16 %v544
  %v641 = vunpack.c.l.b16 %v545
  %v642 = vunpack.c.l.b16 %v546
  %v643 = vunpack.c.l.b16 %v547
  %v644 = vpack.c.b16 %v597, %v596
  %v645 = vpack.c.b16 %v599, %v598
  %v646 = vpack.c.b16 %v601, %v600
  %v647 = vpack.c.b16 %v603, %v602
  %v648 = vpack.c.b16 %v605, %v604
  %v649 = vpack.c.b16 %v607, %v606
  %v650 = vpack.c.b16 %v609, %v608
  %v651 = vpack.c.b16 %v611, %v610
  %v652 = vpack.c.b16 %v613, %v612
  %v653 = vpack.c.b16 %v615, %v614
  %v654 = vpack.c.b16 %v617, %v616
  %v655 = vpack.c.b16 %v619, %v618
  %v656 = vpack.c.b16 %v621, %v620
  %v657 = vpack.c.b16 %v623, %v622
  %v658 = vpack.c.b16 %v625, %v624
  %v659 = vpack.c.b16 %v627, %v626
  %v660 = vpack.c.b16 %v629, %v628
  %v661 = vpack.c.b16 %v631, %v630
  %v662 = vpack.c.b16 %v633, %v632
  %v663 = vpack.c.b16 %v635, %v634
  %v664 = vpack.c.b16 %v637, %v636
  %v665 = vpack.c.b16 %v639, %v638
  %v666 = vpack.c.b16 %v641, %v640
  %v667 = vpack.c.b16 %v643, %v642
  %692 = vmatprep.subr.bf16.mxu0 0
  %693 = vmatpush1.bf16.msra.mxu0 %v644
  %694 = vmatprep.subr.bf16.mxu0 0
  %695 = vmatpush1.bf16.msra.mxu0 %v645
  %696 = vmatprep.subr.bf16.mxu0 0
  %697 = vmatpush1.bf16.msra.mxu0 %v646
  %698 = vmatprep.subr.bf16.mxu0 0
  %699 = vmatpush1.bf16.msra.mxu0 %v647
  %700 = vmatprep.subr.bf16.mxu0 0
  %701 = vmatpush1.bf16.msra.mxu0 %v648
  %702 = vmatprep.subr.bf16.mxu0 0
  %703 = vmatpush1.bf16.msra.mxu0 %v649
  %704 = vmatprep.subr.bf16.mxu0 0
  %705 = vmatpush1.bf16.msra.mxu0 %v650
  %706 = vmatprep.subr.bf16.mxu0 0
  %707 = vmatpush1.bf16.msra.mxu0 %v651
  %708 = vmatprep.subr.bf16.mxu0 0
  %709 = vmatpush1.bf16.msra.mxu0 %v652
  %710 = vmatprep.subr.bf16.mxu0 0
  %711 = vmatpush1.bf16.msra.mxu0 %v653
  %712 = vmatprep.subr.bf16.mxu0 0
  %713 = vmatpush1.bf16.msra.mxu0 %v654
  %714 = vmatprep.subr.bf16.mxu0 0
  %715 = vmatpush1.bf16.msra.mxu0 %v655
  %716 = vmatprep.subr.bf16.mxu0 0
  %717 = vmatpush1.bf16.msra.mxu0 %v656
  %718 = vmatprep.subr.bf16.mxu0 0
  %719 = vmatpush1.bf16.msra.mxu0 %v657
  %720 = vmatprep.subr.bf16.mxu0 0
  %721 = vmatpush1.bf16.msra.mxu0 %v658
  %722 = vmatprep.subr.bf16.mxu0 0
  %723 = vmatpush1.bf16.msra.mxu0 %v659
  %724 = vmatprep.mubr.bf16.mxu0 %v495
  %725 = vmatmul.mubr.bf16.gmra.mrb[0].mxu0 %v494
  %v726 = vpop.f32.mrb[0].mxu0
  %v727 = vadd.f32 0.0, %v726
  %v728 = vpop.f32.mrb[0].mxu0
  %v729 = vpop.f32.mrb[0].mxu0
  %v730 = vadd.f32 0.0, %v729
  %v731 = vpop.f32.mrb[0].mxu0
  %732 = vmatprep.mubr.bf16.mxu0 %v498
  %733 = vmatmul.mubr.bf16.gmra.mrb[0].mxu0 %v497
  %v734 = vpop.f32.mrb[0].mxu0
  %v735 = vadd.f32 0.0, %v734
  %v736 = vpop.f32.mrb[0].mxu0
  %v737 = vpop.f32.mrb[0].mxu0
  %v738 = vadd.f32 0.0, %v737
  %v739 = vpop.f32.mrb[0].mxu0
  %740 = vdwg.mxu0
  %741 = vmatprep.subr.bf16.mxu0 0
  %742 = vmatpush1.bf16.msra.mxu0 %v660
  %743 = vmatprep.subr.bf16.mxu0 0
  %744 = vmatpush1.bf16.msra.mxu0 %v661
  %745 = vmatprep.subr.bf16.mxu0 0
  %746 = vmatpush1.bf16.msra.mxu0 %v662
  %747 = vmatprep.subr.bf16.mxu0 0
  %748 = vmatpush1.bf16.msra.mxu0 %v663
  %749 = vmatprep.subr.bf16.mxu0 0
  %750 = vmatpush1.bf16.msra.mxu0 %v664
  %751 = vmatprep.subr.bf16.mxu0 0
  %752 = vmatpush1.bf16.msra.mxu0 %v665
  %753 = vmatprep.subr.bf16.mxu0 0
  %754 = vmatpush1.bf16.msra.mxu0 %v666
  %755 = vmatprep.subr.bf16.mxu0 0
  %756 = vmatpush1.bf16.msra.mxu0 %v667
  %757 = vmatprep.subr.bf16.mxu0 0
  %758 = vmatpush1.bf16.msra.mxu0 0
  %759 = vmatprep.subr.bf16.mxu0 0
  %760 = vmatpush1.bf16.msra.mxu0 0
  %761 = vmatprep.subr.bf16.mxu0 0
  %762 = vmatpush1.bf16.msra.mxu0 0
  %763 = vmatprep.subr.bf16.mxu0 0
  %764 = vmatpush1.bf16.msra.mxu0 0
  %765 = vmatprep.subr.bf16.mxu0 0
  %766 = vmatpush1.bf16.msra.mxu0 0
  %767 = vmatprep.subr.bf16.mxu0 0
  %768 = vmatpush1.bf16.msra.mxu0 0
  %769 = vmatprep.subr.bf16.mxu0 0
  %770 = vmatpush1.bf16.msra.mxu0 0
  %771 = vmatprep.subr.bf16.mxu0 0
  %772 = vmatpush1.bf16.msra.mxu0 0
  %773 = vmatprep.mubr.bf16.mxu0 0
  %774 = vmatmul.mubr.bf16.gmra.mrb[0].mxu0 %v496
  %v775 = vpop.f32.mrb[0].mxu0
  %v776 = vadd.f32 %v727, %v775
  %v777 = vpop.f32.mrb[0].mxu0
  %v778 = vpop.f32.mrb[0].mxu0
  %v779 = vadd.f32 %v730, %v778
  %v780 = vpop.f32.mrb[0].mxu0
  %781 = vmatprep.mubr.bf16.mxu0 0
  %782 = vmatmul.mubr.bf16.gmra.mrb[0].mxu0 %v499
  %v783 = vpop.f32.mrb[0].mxu0
  %v784 = vadd.f32 %v735, %v783
  %v785 = vpop.f32.mrb[0].mxu0
  %v786 = vpop.f32.mrb[0].mxu0
  %v787 = vadd.f32 %v738, %v786
  %v788 = vpop.f32.mrb[0].mxu0
  %789 = vdwg.mxu0
  %v790 = vadd.f32 %v776, %v779
  %v791 = vadd.f32 %v790, %v784
  %v792 = vadd.f32 %v791, %v787
  %v793 = vrot.slane %v792, 4
  %v794 = vadd.f32 %v792, %v793
  %v795 = vrot.slane %v794, 2
  %v796 = vadd.f32 %v794, %v795
  %v797 = vrot.slane %v796, 1
  %v798 = vadd.f32 %v796, %v797
  %799 = vrot.lane.b32.xlu0 %v798, 8
  %v800 = vpop.permute.xlu0 %799
  %v801 = vadd.f32 %v798, %v800
  %802 = vrot.lane.b32.xlu0 %v801, 16
  %v803 = vpop.permute.xlu0 %802
  %v804 = vadd.f32 %v801, %v803
  %805 = vrot.lane.b32.xlu0 %v804, 32
  %v806 = vpop.permute.xlu0 %805
  %v807 = vadd.f32 %v804, %v806
  %808 = vrot.lane.b32.xlu0 %v807, 64
  %v809 = vpop.permute.xlu0 %808
  %v810 = vadd.f32 %v807, %v809
  %v811 = vmul.f32 %v776, %v776
  %v812 = vmul.f32 %v779, %v779
  %v813 = vmul.f32 %v784, %v784
  %v814 = vmul.f32 %v787, %v787
  %v815 = vadd.f32 %v811, %v812
  %v816 = vadd.f32 %v815, %v813
  %v817 = vadd.f32 %v816, %v814
  %v818 = vrot.slane %v817, 4
  %v819 = vadd.f32 %v817, %v818
  %v820 = vrot.slane %v819, 2
  %v821 = vadd.f32 %v819, %v820
  %v822 = vrot.slane %v821, 1
  %v823 = vadd.f32 %v821, %v822
  %824 = vrot.lane.b32.xlu0 %v823, 8
  %v825 = vpop.permute.xlu0 %824
  %v826 = vadd.f32 %v823, %v825
  %827 = vrot.lane.b32.xlu0 %v826, 16
  %v828 = vpop.permute.xlu0 %827
  %v829 = vadd.f32 %v826, %v828
  %830 = vrot.lane.b32.xlu0 %v829, 32
  %v831 = vpop.permute.xlu0 %830
  %v832 = vadd.f32 %v829, %v831
  %833 = vrot.lane.b32.xlu0 %v832, 64
  %v834 = vpop.permute.xlu0 %833
  %v835 = vadd.f32 %v832, %v834
  %v836 = vmul.f32 %v810, %v433
  %v837 = vmul.f32 %v835, %v433
  %v838 = vmul.f32 %v836, %v836
  %v839 = vsub.f32 %v837, %v838
  %v840 = vmax.f32 %v839, 0.0
  %v841 = vld [vmem:[%s7] sm:$0x1]
  %v842 = vadd.f32 %v840, 1e-05
  %v843 = vrsqrt.pop %v842
  %v844 = vmul.f32 %v841, %v843
  %v845 = vld [vmem:[%s8] sm:$0x1]
  %v846 = vmul.f32 %v836, %v844
  %v847 = vsub.f32 %v845, %v846
  %v849 = vlaneseq
  %v850 = vshrl.u32 %v849, 7
  %v851 = vsub.s32 0, %v850
  %v852 = vrot.slane %v844, %v851
  %v854 = vmul.f32 %v776, %v852
  %v855 = vmul.f32 %v779, %v852
  %v856 = vmul.f32 %v784, %v852
  %v857 = vmul.f32 %v787, %v852
  %v859 = vlaneseq
  %v860 = vshrl.u32 %v859, 7
  %v861 = vsub.s32 0, %v860
  %v862 = vrot.slane %v847, %v861
  %v864 = vadd.f32 %v854, %v862
  %v865 = vadd.f32 %v855, %v862
  %v866 = vadd.f32 %v856, %v862
  %v867 = vadd.f32 %v857, %v862
  %v868 = vmax.f32 %v864, 0.0
  %v869 = vmax.f32 %v865, 0.0
  %v870 = vmax.f32 %v866, 0.0
  %v871 = vmax.f32 %v867, 0.0
  %872 = vst [vmem:[%s9] sm:$0xff] %v868
  %873 = vst [vmem:[%s9 + $0x8] sm:$0xff] %v869
  %874 = vst [vmem:[%s9 + $0x10] sm:$0xff] %v870
  %875 = vst [vmem:[%s9 + $0x18] sm:$0xff] %v871
  // Predicated region
  $region38: #{double_conv_forward.1} parent=0 // pred_check
    _
  $region39: #{double_conv_forward.1} parent=0 // pred_check_branch
    %877 = sbr.rel (0) target = $region41
  $region40: #{double_conv_forward.1} parent=0 // pred_region
    _
  $region41: #{double_conv_forward.1} parent=0 // pred_fallthru
    _
  // Predicated region
  $region42: #{double_conv_forward.1} parent=0 // pred_check
    _
  $region43: #{double_conv_forward.1} parent=0 // pred_check_branch
    %879 = sbr.rel (0) target = $region45
  $region44: #{double_conv_forward.1} parent=0 // pred_region
    _
  $region45: #{double_conv_forward.1} parent=0 // pred_fallthru
    _

</llo_original>
